<compile_context>
chip_gen: v7x
topology: tpu7x:2x2x1
jax: 0.10.0
libtpu: 0.0.40
codegen_flags: <defaults>
</compile_context>

<pallas_src>
import functools

import jax
import jax.numpy as jnp
from jax.experimental import pallas as pl
from jax.experimental.pallas import tpu as pltpu


def _rmsnorm_kernel(x_ref, w_ref, o_ref, *, eps):
    x = x_ref[...]                                            # (tm, H), input dtype
    xf = x.astype(jnp.float32)                                # f32 only for the reduction
    var = jnp.mean(xf * xf, axis=-1, keepdims=True)           # (tm, 1), f32
    inv = jax.lax.rsqrt(var + eps).astype(x.dtype)            # EUP rsqrt, cast once per row
    # Elementwise scale + weight multiply stay in the input dtype (w_ref is
    # pre-cast in the wrapper), so no full-tile f32 intermediate is live.
    o_ref[...] = (w_ref[...] * (x * inv)).astype(o_ref.dtype)


def _vmem_capacity_bytes():
    """Physical VMEM per TensorCore; conservative fallback if the query fails."""
    try:
        return int(pltpu.get_tpu_info().vmem_capacity_bytes)
    except Exception:
        return 64 * 1024 * 1024   # v7x per-TC value (the smallest current part)


def _pick_block_rows(rows, hidden, itemsize, vmem_budget):
    """VMEM-budgeted, sublane-aligned row-block size.

    Targets >= 4 grid steps (>= 2 per TC on megacore parts) and an even step
    count when rows allow, while keeping the double-buffered working set under
    `vmem_budget`.
    """
    # Sublane packing quantum: f32 -> 8, bf16 -> 16, int8/fp8 -> 32.
    q = max(8, 32 // itemsize)
    rows_q = -(-rows // q) * q

    # Working set per row: double-buffered input + double-buffered output at
    # the input dtype, plus ~1 f32 row of squared/reduction temporaries.
    per_row = hidden * (4 * itemsize + 4)
    cap = (vmem_budget // per_row // q) * q
    cap = max(q, min(4096, cap, rows_q))

    min_steps = 4 if rows_q >= 4 * q else 1

    best = None
    b = cap
    while b >= q:
        steps = -(-rows // b)
        if steps >= min_steps:
            if best is None:
                best = b                       # largest block meeting min-step target
            if steps % 2 == 0 or steps == 1:
                return b                       # even step count balances v7x's 2 TCs
            if best - b >= 8 * q:              # don't shrink too far chasing parity
                break
        b -= q
    return best if best is not None else cap


def llama_rmsnorm(x, weight, eps=1e-5, block_rows=None):
    """x: (..., hidden); weight: (hidden,). Returns same shape/dtype as x."""
    orig_shape = x.shape
    hidden = orig_shape[-1]
    x2 = x.reshape(-1, hidden)
    rows = x2.shape[0]
    itemsize = jnp.dtype(x.dtype).itemsize

    vmem_cap = _vmem_capacity_bytes()
    # Tile budget ~ half of physical VMEM; scoped limit ~ 3/4 with >=16 MiB
    # headroom for internal scratch (v7x: 48 MiB, v5e/v6e: 96 MiB).
    vmem_budget = vmem_cap // 2
    vmem_limit = max(vmem_budget, min(vmem_cap - 16 * 1024 * 1024,
                                      (vmem_cap * 3) // 4))

    if block_rows is None:
        block_rows = _pick_block_rows(rows, hidden, itemsize, vmem_budget)

    grid = (pl.cdiv(rows, block_rows),)           # partial tail block; no padding pass
    # Pre-cast weight to the activation dtype so the multiply stays in x.dtype.
    w2 = weight.astype(x.dtype).reshape(1, hidden)

    kernel = functools.partial(_rmsnorm_kernel, eps=eps)

    out = pl.pallas_call(
        kernel,
        out_shape=jax.ShapeDtypeStruct((rows, hidden), x.dtype),
        grid_spec=pltpu.PrefetchScalarGridSpec(
            num_scalar_prefetch=0,
            grid=grid,
            in_specs=[
                pl.BlockSpec((block_rows, hidden), lambda i: (i, 0)),
                # Constant index_map -> same (1, H) weight block every step.
                pl.BlockSpec((1, hidden), lambda i: (0, 0)),
            ],
            out_specs=pl.BlockSpec((block_rows, hidden), lambda i: (i, 0)),
        ),
        compiler_params=pltpu.CompilerParams(
            dimension_semantics=("parallel",),
            vmem_limit_bytes=int(vmem_limit),
        ),
    )(x2, w2)

    return out.reshape(orig_shape)


if __name__ == "__main__":
    key = jax.random.PRNGKey(0)
    batch, seq, hidden = 2, 8, 32
    kx, kw = jax.random.split(key)
    x = jax.random.normal(kx, (batch, seq, hidden), dtype=jnp.float32)
    # nn.Parameter(torch.ones(hidden)) at init; perturb so the scale path is
    # actually exercised.
    weight = jnp.ones((hidden,), jnp.float32) + 0.1 * jax.random.normal(
        kw, (hidden,), dtype=jnp.float32
    )
    eps = 1e-5

    out = llama_rmsnorm(x, weight, eps=eps)
    out = jax.block_until_ready(out)

    # Pure-JAX reference (matches the torch module's forward).
    var = jnp.mean(x * x, axis=-1, keepdims=True)
    ref = weight * (x * jax.lax.rsqrt(var + eps))
    assert out.shape == x.shape and out.dtype == x.dtype
    assert jnp.allclose(out, ref, atol=1e-5, rtol=1e-5)

    print("KERNEL_OK")
</pallas_src>

<mosaic_0001>
module attributes {stable_mosaic.version = 11 : i64} {
  func.func @_rmsnorm_kernel(%arg0: i32, %arg1: memref<16x32xf32, #tpu.memory_space<vmem>>, %arg2: memref<1x32xf32, #tpu.memory_space<vmem>>, %arg3: memref<16x32xf32, #tpu.memory_space<vmem>>) attributes {dimension_semantics = [#tpu.dimension_semantics<parallel>], iteration_bounds = array<i64: 1>, scalar_prefetch = 0 : i64, scratch_operands = 0 : i64, tpu.core_type = #tpu.core_type<tc>, window_params = [{transform_indices = @transform_0, window_bounds = array<i64: 16, 32>}, {pipeline_mode = #tpu.pipeline_mode<synchronous>, transform_indices = @transform_1, window_bounds = array<i64: 1, 32>}, {transform_indices = @transform_2, window_bounds = array<i64: 16, 32>}]} {
    %c0 = arith.constant 0 : index
    %c0_0 = arith.constant 0 : index
    %0 = vector.load %arg1[%c0, %c0_0] : memref<16x32xf32, #tpu.memory_space<vmem>>, vector<16x32xf32>
    %1 = arith.mulf %0, %0 : vector<16x32xf32>
    %cst = arith.constant dense<0.000000e+00> : vector<16xf32>
    %2 = vector.multi_reduction <add>, %1, %cst [1] : vector<16x32xf32> to vector<16xf32>
    %3 = vector.shape_cast %2 : vector<16xf32> to vector<16x1xf32>
    %cst_1 = arith.constant 3.200000e+01 : f32
    %4 = vector.broadcast %cst_1 : f32 to vector<16x1xf32>
    %5 = arith.divf %3, %4 : vector<16x1xf32>
    %cst_2 = arith.constant 9.99999974E-6 : f32
    %6 = vector.broadcast %cst_2 : f32 to vector<16x1xf32>
    %7 = arith.addf %5, %6 : vector<16x1xf32>
    %8 = math.rsqrt %7 : vector<16x1xf32>
    %c0_3 = arith.constant 0 : index
    %c0_4 = arith.constant 0 : index
    %9 = vector.load %arg2[%c0_3, %c0_4] : memref<1x32xf32, #tpu.memory_space<vmem>>, vector<1x32xf32>
    %10 = vector.broadcast %8 : vector<16x1xf32> to vector<16x32xf32>
    %11 = arith.mulf %0, %10 : vector<16x32xf32>
    %12 = vector.broadcast %9 : vector<1x32xf32> to vector<16x32xf32>
    %13 = arith.mulf %12, %11 : vector<16x32xf32>
    %c0_5 = arith.constant 0 : index
    %c0_6 = arith.constant 0 : index
    %14 = vector.load %arg3[%c0_5, %c0_6] : memref<16x32xf32, #tpu.memory_space<vmem>>, vector<16x32xf32>
    tpu.vector_store %arg3[%c0_5, %c0_6], %13 {strides = array<i32>} : memref<16x32xf32, #tpu.memory_space<vmem>>, vector<16x32xf32>,
    return
  }
  func.func @transform_0(%arg0: i32) -> (i32, i32) {
    %c0_i32 = arith.constant 0 : i32
    %c0_i32_0 = arith.constant 0 : i32
    return %arg0, %c0_i32 : i32, i32
  }
  func.func @transform_1(%arg0: i32) -> (i32, i32) {
    %c0_i32 = arith.constant 0 : i32
    %c0_i32_0 = arith.constant 0 : i32
    %c0_i32_1 = arith.constant 0 : i32
    return %c0_i32, %c0_i32_0 : i32, i32
  }
  func.func @transform_2(%arg0: i32) -> (i32, i32) {
    %c0_i32 = arith.constant 0 : i32
    %c0_i32_0 = arith.constant 0 : i32
    return %arg0, %c0_i32 : i32, i32
  }
}

</mosaic_0001>

<llo_original>
// kernel: tpu_custom_call.1
$region0: #{tpu_custom_call.1}
  #allocation0 [shape = 'u32[]', space=smem, size = 0x4, offset = 0x4, fixed_abs, tag = 'smem constant byte address 0x4 - core index']
  #allocation1 [shape = 'u32[144,128]{1,0:T(1,128)}', space=vmem, size = 0x12000, scoped, tag = 'internal scratch']
  %s0 = inlined_call_operand.hbm [shape: f32[16,32], index: 0, kind: input, shape index: {}]
  %s1 = inlined_call_operand.vmem [shape: f32[1,32], index: 1, kind: input, shape index: {}]
  %s2 = inlined_call_operand.hbm [shape: f32[16,32], index: 2, kind: output, shape index: {}]
  %s3 = sld [smem:[#allocation0]]
  $region22: #{tpu_custom_call.1} parent=0
    _
  %s5 = ssub.s32 1, %s3
  %s6 = scalar_select 0, %s5, %s3
  $region1: #{tpu_custom_call.1} parent=0
    #allocation2 [shape = 'u8[8192]{0}', space=vmem, size = 0x2000, scoped, tag = 'input window, operand 0, single buffered']
    #allocation3 [shape = 's32[1]{0}', space=sflag, size = 0x4, scoped, tag = 'scoped memory for tpu_custom_call.1']
    #allocation4 [shape = 's32[1]{0}', space=sflag, size = 0x4, scoped, tag = 'scoped memory for tpu_custom_call.1']
    #allocation5 [shape = 'u8[8192]{0}', space=vmem, size = 0x2000, scoped, tag = 'output window, operand 0, single buffered']
    %7 = vsyncpa [#allocation3], 0
    %8 = vsyncpa [#allocation4], 0
    // Predicated region
    $region2: #{tpu_custom_call.1} parent=1 // pred_check
      _
    $region3: #{tpu_custom_call.1} parent=1 // pred_check_branch
      %10 = sbr.rel (0) target = $region5
    $region4: #{tpu_custom_call.1} parent=1 // pred_region
      %s12 = ssub.s32 256, 256
      %13 = vsyncadd [#allocation3], %s12
      %s14 = sshll.u32 [#allocation2], 4
      %s15 = int_to_ptr.vmem [resolvable:$true] %s14
      %20 = dma.hbm_to_vmem [thread:$0]  %s0, 256, %s15, [#allocation3], 128, 128, 8
    $region5: #{tpu_custom_call.1} parent=1 // pred_fallthru
      _
    // Predicated region
    $region6: #{tpu_custom_call.1} parent=1 // pred_check
      _
    $region7: #{tpu_custom_call.1} parent=1 // pred_check_branch
      %22 = sbr.rel (0) target = $region9
    $region8: #{tpu_custom_call.1} parent=1 // pred_region
      _
    $region9: #{tpu_custom_call.1} parent=1 // pred_fallthru
      _
    // Predicated region
    $region10: #{tpu_custom_call.1} parent=1 // pred_check
      _
    $region11: #{tpu_custom_call.1} parent=1 // pred_check_branch
      %24 = sbr.rel (0) target = $region13
    $region12: #{tpu_custom_call.1} parent=1 // pred_region
      %25 = dma.done [#allocation3], 256
    $region13: #{tpu_custom_call.1} parent=1 // pred_fallthru
      _
    %v26 = vld [vmem:[#allocation2] sm:$0xff]
    %v27 = vld [vmem:[#allocation2 + $0x8] sm:$0xff]
    %v28 = vmul.f32 %v26, %v26
    %v29 = vmul.f32 %v27, %v27
    %vm30 = vcmask 261120
    %v31 = vsel %vm30, %v28, 0.0
    %32 = vadd.xlane.f32.xlu0 %v31
    %v33 = vpop.xlane.xlu0 %32
    %v34 = vsel %vm30, %v29, 0.0
    %35 = vadd.xlane.f32.xlu0 %v34
    %v36 = vpop.xlane.xlu0 %35
    %v37 = vrcp.pop 32.0
    %v38 = vmul.f32 %v33, %v37
    %v39 = vmul.f32 %v36, %v37
    %v40 = vadd.f32 %v38, 1e-05
    %v41 = vadd.f32 %v39, 1e-05
    %v42 = vrsqrt.pop %v40
    %v43 = vrsqrt.pop %v41
    %v44 = vld [vmem:[%s1] sm:$0x1]
    %v45 = vmul.f32 %v26, %v42
    %v46 = vmul.f32 %v27, %v43
    %v48 = vlaneseq
    %v49 = vshrl.u32 %v48, 7
    %v50 = vsub.s32 0, %v49
    %v51 = vrot.slane %v44, %v50
    %v53 = vmul.f32 %v51, %v45
    %v54 = vmul.f32 %v51, %v46
    %55 = vst.msk [vmem:[#allocation5] sm:$0xff] %vm30, %v53
    %56 = vst.msk [vmem:[#allocation5 + $0x8] sm:$0xff] %vm30, %v54
    // Predicated region
    $region14: #{tpu_custom_call.1} parent=1 // pred_check
      _
    $region15: #{tpu_custom_call.1} parent=1 // pred_check_branch
      %58 = sbr.rel (0) target = $region17
    $region16: #{tpu_custom_call.1} parent=1 // pred_region
      %s60 = ssub.s32 256, 256
      %61 = vsyncadd [#allocation4], %s60
      %s62 = sshll.u32 [#allocation5], 4
      %s63 = int_to_ptr.vmem [resolvable:$true] %s62
      %68 = dma.vmem_to_hbm [thread:$0]  %s63, 256, %s2, [#allocation4], 128, 128, 8
    $region17: #{tpu_custom_call.1} parent=1 // pred_fallthru
      _
    // Predicated region
    $region18: #{tpu_custom_call.1} parent=1 // pred_check
      _
    $region19: #{tpu_custom_call.1} parent=1 // pred_check_branch
      %70 = sbr.rel (0) target = $region21
    $region20: #{tpu_custom_call.1} parent=1 // pred_region
      %71 = dma.done [#allocation4], 256
    $region21: #{tpu_custom_call.1} parent=1 // pred_fallthru
      _
    %72 = vsyncpa [#allocation3], 1
    %73 = vsyncpa [#allocation4], 1

</llo_original>
